<compile_context>
chip_gen: v5e
topology: v5e:2x2
jax: 0.10.0
libtpu: 0.0.40
codegen_flags: <defaults>
</compile_context>

<pallas_src>
import functools

import jax
import jax.numpy as jnp
from jax.experimental import pallas as pl
from jax.experimental.pallas import tpu as pltpu


_F32 = 4
_LANE_DENSE_MAX_C = 256      # below this, put the batch on the lane axis
_NEG_FILL = -1.0e30          # finite "-inf" (avoids inf-inf NaNs in running max)


def _round_up(x, m):
    return ((x + m - 1) // m) * m


def _cdiv(a, b):
    return (a + b - 1) // b


def _tpu_config():
    """(working-set budget, scoped vmem limit, is_small_vmem) per generation.

    v5e/v6e (128 MiB VMEM/core): relaxed working-set model -- VMEM is dominated
    by the 2x double-buffered input tiles, elementwise temporaries mostly live
    in vregs.  v7x (64 MiB/core, 2 TCs): conservative model; callers also
    enforce >=4 parallel grid steps and deeper pipelining.
    """
    phys = 64 * 1024 * 1024
    try:
        phys = int(pltpu.get_tpu_info().vmem_capacity_bytes)
    except Exception:
        pass
    phys = min(phys, 128 * 1024 * 1024)
    small = phys < 128 * 1024 * 1024
    working = int(phys * (0.30 if small else 0.45))
    limit = int(phys * 0.50)
    return working, limit, small


def _pick_tile(n_units, bytes_per_unit, budget, gran, cap, min_steps=1):
    """Largest batch tile (multiple of `gran`, <= cap) whose double-buffered
    working set fits `budget`, optionally clamped so the (parallel) batch axis
    has at least `min_steps` grid steps (v7x: keep both TensorCores busy)."""
    t = (budget // max(bytes_per_unit, 1)) // gran * gran
    t = max(gran, min(t, cap))
    if min_steps > 1:
        t = min(t, max(gran, _round_up(_cdiv(n_units, min_steps), gran)))
    t = min(t, _round_up(n_units, gran))
    return int(t)


def _maybe_buffered_spec(block_shape, index_map, deep):
    """3-deep input pipelining on v7x-class parts; graceful fallback if this
    Pallas build does not expose BlockSpec(pipeline_mode=...)."""
    if deep:
        try:
            return pl.BlockSpec(block_shape, index_map,
                                pipeline_mode=pl.Buffered(3))
        except (TypeError, AttributeError):
            pass
    return pl.BlockSpec(block_shape, index_map)


# --------------------------------------------------------------------------
# Kernels
# --------------------------------------------------------------------------
def _gce_lane_kernel(logits_ref, targets_ref, loss_ref, *, q):
    """Small C: read the native (TN, C) tile and transpose it in VMEM so the
    batch sits on the lane axis (full lane utilization, lane-dense output).

    logits_ref : (TN, C) float    targets_ref: (1, TN) int32
    loss_ref   : (1, TN) float32  -- lane-dense output row (unmasked stores)
    """
    x = jnp.transpose(logits_ref[...].astype(jnp.float32))       # (C, TN), XLU
    t = targets_ref[...]                                         # (1, TN)

    m = jnp.max(x, axis=0, keepdims=True)                        # (1, TN)
    z = x - m
    log_sum_exp = jnp.log(jnp.sum(jnp.exp(z), axis=0, keepdims=True))

    cls = jax.lax.broadcasted_iota(jnp.int32, x.shape, 0)        # class / sublane
    z_t = jnp.sum(jnp.where(cls == t, z, 0.0), axis=0, keepdims=True)

    log_p_t = z_t - log_sum_exp                                  # log softmax @ t
    ce = -log_p_t
    weight = jnp.exp(q * log_p_t) * q                            # p_t ** q * q
    loss_ref[...] = (ce * weight).astype(loss_ref.dtype)


def _gce_row_kernel(logits_ref, targets_ref, loss_ref, *, q):
    """Moderate C: one (TN, C) batch tile holds all classes.

    logits_ref : (TN, C)   targets_ref: (TN, 1)   loss_ref: (TN, 1)
    """
    # f32 compute throughout: the kernel is HBM-bound, so a bf16 VPU/EUP path
    # would not move the roofline (and v5e lacks bf16 VPU/EUP anyway).
    x = logits_ref[...].astype(jnp.float32)                      # (TN, C)
    t = targets_ref[...]                                         # (TN, 1)

    m = jnp.max(x, axis=-1, keepdims=True)
    z = x - m
    log_sum_exp = jnp.log(jnp.sum(jnp.exp(z), axis=-1, keepdims=True))

    col = jax.lax.broadcasted_iota(jnp.int32, x.shape, 1)
    z_t = jnp.sum(jnp.where(col == t, z, 0.0), axis=-1, keepdims=True)

    log_p_t = z_t - log_sum_exp
    ce = -log_p_t
    weight = jnp.exp(q * log_p_t) * q
    loss_ref[...] = (ce * weight).astype(loss_ref.dtype)


def _gce_chunked_kernel(logits_ref, targets_ref, loss_ref,
                        m_scr, s_scr, xt_scr, *, q, class_chunk, num_classes):
    """Vocab-scale C: online softmax over class chunks (last grid axis).

    Padded / out-of-range class columns of the ragged last chunk are masked
    in-kernel (no host-side pad copy of logits).
    """
    k = pl.program_id(1)

    @pl.when(k == 0)
    def _init():
        m_scr[...] = jnp.full_like(m_scr, _NEG_FILL)
        s_scr[...] = jnp.zeros_like(s_scr)
        xt_scr[...] = jnp.zeros_like(xt_scr)

    x = logits_ref[...].astype(jnp.float32)                      # (TN, TC)
    t = targets_ref[...]                                         # (TN, 1)

    col = jax.lax.broadcasted_iota(jnp.int32, x.shape, 1) + k * class_chunk
    # Mask classes past C in the ragged last chunk; finite fill -> exp() == 0
    # and no inf-inf NaNs in the running-max update.
    x = jnp.where(col < num_classes, x, _NEG_FILL)

    # Exactly one chunk contains the target column for each row.
    xt_scr[...] += jnp.sum(jnp.where(col == t, x, 0.0), axis=-1, keepdims=True)

    # Online-softmax running max / sum(exp) (raw target logit needs no rescale).
    m_new = jnp.maximum(m_scr[...], jnp.max(x, axis=-1, keepdims=True))
    s_scr[...] = (s_scr[...] * jnp.exp(m_scr[...] - m_new)
                  + jnp.sum(jnp.exp(x - m_new), axis=-1, keepdims=True))
    m_scr[...] = m_new

    @pl.when(k == pl.num_programs(1) - 1)
    def _finalize():
        log_p_t = (xt_scr[...] - m_scr[...]) - jnp.log(s_scr[...])
        ce = -log_p_t
        weight = jnp.exp(q * log_p_t) * q
        loss_ref[...] = (ce * weight).astype(loss_ref.dtype)


# --------------------------------------------------------------------------
# pallas_call builders (no wrapper-side transpose / pad of logits)
# --------------------------------------------------------------------------
def _gce_lane_call(logits, targets, q, cfg, block_batch):
    working, limit, small_vmem = cfg
    N, C = logits.shape
    in_bytes = jnp.dtype(logits.dtype).itemsize
    # double-buffered input tile + transposed f32 copy + ~2 f32 temporaries
    bytes_per_elem = C * (2 * in_bytes + 3 * _F32)
    min_steps = 4 if small_vmem else 1
    if block_batch:
        tn = _round_up(block_batch, 128)
    else:
        # Cap raised so the input tile reaches ~2-4 MB (per-step overhead <10%).
        tn = _pick_tile(N, bytes_per_elem, working, 128, 32768, min_steps)
    if tn >= N:
        tn = N        # single block == full array extent (always layout-legal)

    tgt = targets.astype(jnp.int32).reshape(1, N)

    out = pl.pallas_call(
        functools.partial(_gce_lane_kernel, q=q),
        out_shape=jax.ShapeDtypeStruct((1, N), jnp.float32),
        grid_spec=pltpu.PrefetchScalarGridSpec(
            num_scalar_prefetch=0,
            grid=(_cdiv(N, tn),),
            in_specs=[
                pl.BlockSpec((tn, C), lambda i: (i, 0)),
                pl.BlockSpec((1, tn), lambda i: (0, i)),
            ],
            out_specs=pl.BlockSpec((1, tn), lambda i: (0, i)),
        ),
        compiler_params=pltpu.CompilerParams(
            dimension_semantics=("parallel",),
            vmem_limit_bytes=limit),
    )(logits, tgt)
    return out[0, :]


def _gce_row_call(logits, targets, q, cfg, block_batch):
    working, limit, small_vmem = cfg
    N, C = logits.shape
    in_bytes = jnp.dtype(logits.dtype).itemsize
    gran = max(8, 32 // in_bytes)                   # 8 for f32, 16 for bf16
    # double-buffered input tile + ~2 f32 temporaries per element
    bytes_per_row = C * (2 * in_bytes + 2 * _F32)
    min_steps = 4 if small_vmem else 1
    if block_batch:
        tn = _round_up(block_batch, gran)
    else:
        tn = _pick_tile(N, bytes_per_row, working, gran, 4096, min_steps)
    if tn >= N:
        tn = N

    tgt = targets.astype(jnp.int32).reshape(N, 1)

    out = pl.pallas_call(
        functools.partial(_gce_row_kernel, q=q),
        out_shape=jax.ShapeDtypeStruct((N, 1), jnp.float32),
        grid_spec=pltpu.PrefetchScalarGridSpec(
            num_scalar_prefetch=0,
            grid=(_cdiv(N, tn),),
            in_specs=[
                pl.BlockSpec((tn, C), lambda i: (i, 0)),
                pl.BlockSpec((tn, 1), lambda i: (i, 0)),
            ],
            out_specs=pl.BlockSpec((tn, 1), lambda i: (i, 0)),
        ),
        compiler_params=pltpu.CompilerParams(
            dimension_semantics=("parallel",),
            vmem_limit_bytes=limit),
    )(logits, tgt)
    return out[:, 0]


def _gce_chunked_call(logits, targets, q, cfg, block_batch, class_chunk):
    working, limit, small_vmem = cfg
    N, C = logits.shape
    in_bytes = jnp.dtype(logits.dtype).itemsize
    gran = max(8, 32 // in_bytes)

    if class_chunk:
        tc = class_chunk
    else:
        # Chunk width near 2048 lanes that minimizes last-chunk padding
        # (e.g. C=3000 -> tc=1536, 72 wasted columns instead of 1096).
        n_chunks = max(1, _cdiv(C, 2048))
        tc = max(128, _round_up(_cdiv(C, n_chunks), 128))
    tc = min(tc, _round_up(C, 128))

    # double-buffered (tn, tc) input + ~2 f32 temps, plus the three (tn, 1)
    # f32 accumulators which are lane-padded to (tn, 128) tiles in VMEM.
    bytes_per_row = tc * (2 * in_bytes + 2 * _F32) + 3 * 128 * _F32
    min_steps = 4 if small_vmem else 1
    if block_batch:
        tn = _round_up(block_batch, gran)
    else:
        tn = _pick_tile(N, bytes_per_row, working, gran, 2048, min_steps)
    if tn >= N:
        tn = N

    tgt = targets.astype(jnp.int32).reshape(N, 1)

    logits_spec = _maybe_buffered_spec((tn, tc), lambda i, k: (i, k),
                                       deep=small_vmem)

    out = pl.pallas_call(
        functools.partial(_gce_chunked_kernel, q=q, class_chunk=tc,
                          num_classes=C),
        out_shape=jax.ShapeDtypeStruct((N, 1), jnp.float32),
        grid_spec=pltpu.PrefetchScalarGridSpec(
            num_scalar_prefetch=0,
            grid=(_cdiv(N, tn), _cdiv(C, tc)),
            in_specs=[
                logits_spec,
                pl.BlockSpec((tn, 1), lambda i, k: (i, 0)),
            ],
            out_specs=pl.BlockSpec((tn, 1), lambda i, k: (i, 0)),
            scratch_shapes=[
                pltpu.VMEM((tn, 1), jnp.float32),   # running max
                pltpu.VMEM((tn, 1), jnp.float32),   # running sum(exp)
                pltpu.VMEM((tn, 1), jnp.float32),   # gathered target logit
            ]),
        compiler_params=pltpu.CompilerParams(
            dimension_semantics=("parallel", "arbitrary"),
            vmem_limit_bytes=limit),
    )(logits, tgt)
    return out[:, 0]


# --------------------------------------------------------------------------
# Public wrapper
# --------------------------------------------------------------------------
def generalized_ce_loss(logits, targets, q=0.7, *,
                        impl=None, block_batch=None, class_chunk=None):
    """Pallas TPU implementation of GeneralizedCELoss.forward.

    logits : (N, C) float;  targets: (N,) int;  returns (N,) float32 loss.
    """
    # TODO(synk): the PyTorch module raises on NaN via host-side np.isnan
    # checks, and torch.gather errors on out-of-range targets; there is no
    # clean in-kernel exception equivalent, so those guards are (silently)
    # omitted -- out-of-range targets produce a finite garbage loss.
    N, C = logits.shape
    cfg = _tpu_config()
    working = cfg[0]
    in_bytes = jnp.dtype(logits.dtype).itemsize
    bytes_per_row = C * (2 * in_bytes + 2 * _F32)

    if impl is None:
        if C <= _LANE_DENSE_MAX_C:
            impl = "lane"      # small C: batch on lanes, lane-dense output
        elif 8 * bytes_per_row <= working:
            impl = "row"       # moderate C: whole class row per tile
        else:
            impl = "chunked"   # vocab-scale C: online softmax over C chunks

    if impl == "lane":
        return _gce_lane_call(logits, targets, q, cfg, block_batch)
    if impl == "row":
        return _gce_row_call(logits, targets, q, cfg, block_batch)
    return _gce_chunked_call(logits, targets, q, cfg, block_batch, class_chunk)


def _reference(logits, targets, q=0.7):
    """Pure-JAX reference mirroring the PyTorch forward."""
    x = logits.astype(jnp.float32)
    idx = targets[:, None].astype(jnp.int32)
    p = jax.nn.softmax(x, axis=1)
    yg = jnp.take_along_axis(p, idx, axis=1)[:, 0]
    weight = yg ** q * q
    ce = -jnp.take_along_axis(jax.nn.log_softmax(x, axis=1), idx, axis=1)[:, 0]
    return ce * weight


if __name__ == "__main__":
    key = jax.random.PRNGKey(0)
    k1, k2, k3, k4 = jax.random.split(key, 4)

    # Small shapes consistent with the module (classifier logits + int labels).
    N, C = 8, 32
    logits = jax.random.normal(k1, (N, C), dtype=jnp.float32)
    targets = jax.random.randint(k2, (N,), 0, C, dtype=jnp.int32)

    loss = generalized_ce_loss(logits, targets, q=0.7)          # lane-dense path
    jax.block_until_ready(loss)
    ref = _reference(logits, targets, q=0.7)
    assert loss.shape == (N,)
    assert jnp.allclose(loss, ref, atol=1e-5, rtol=1e-4), (loss, ref)

    # Exercise the batch-tiled row path and the C-chunked online-softmax path
    # (with ragged batch blocks and a masked ragged class chunk) at small
    # shapes against the same reference.
    n2, c2 = 20, 200
    logits2 = jax.random.normal(k3, (n2, c2), dtype=jnp.float32)
    targets2 = jax.random.randint(k4, (n2,), 0, c2, dtype=jnp.int32)
    ref2 = _reference(logits2, targets2, q=0.7)

    loss_row = generalized_ce_loss(logits2, targets2, q=0.7,
                                   impl="row", block_batch=8)
    jax.block_until_ready(loss_row)
    assert jnp.allclose(loss_row, ref2, atol=1e-5, rtol=1e-4), (loss_row, ref2)

    loss_chk = generalized_ce_loss(logits2, targets2, q=0.7,
                                   impl="chunked", block_batch=8,
                                   class_chunk=128)
    jax.block_until_ready(loss_chk)
    assert jnp.allclose(loss_chk, ref2, atol=1e-5, rtol=1e-4), (loss_chk, ref2)

    print("KERNEL_OK")
</pallas_src>

<mosaic_0001>
module attributes {stable_mosaic.version = 11 : i64} {
  func.func @_gce_lane_kernel(%arg0: i32, %arg1: memref<8x32xf32, #tpu.memory_space<vmem>>, %arg2: memref<1x8xi32, #tpu.memory_space<vmem>>, %arg3: memref<1x8xf32, #tpu.memory_space<vmem>>) attributes {dimension_semantics = [#tpu.dimension_semantics<parallel>], iteration_bounds = array<i64: 1>, scalar_prefetch = 0 : i64, scratch_operands = 0 : i64, tpu.core_type = #tpu.core_type<tc>, window_params = [{transform_indices = @transform_0, window_bounds = array<i64: 8, 32>}, {transform_indices = @transform_1, window_bounds = array<i64: 1, 8>}, {transform_indices = @transform_2, window_bounds = array<i64: 1, 8>}]} {
    %c0 = arith.constant 0 : index
    %c0_0 = arith.constant 0 : index
    %0 = vector.load %arg1[%c0, %c0_0] : memref<8x32xf32, #tpu.memory_space<vmem>>, vector<8x32xf32>
    %1 = tpu.transpose %0, [1, 0] : vector<8x32xf32> -> vector<32x8xf32>
    %c0_1 = arith.constant 0 : index
    %c0_2 = arith.constant 0 : index
    %2 = vector.load %arg2[%c0_1, %c0_2] : memref<1x8xi32, #tpu.memory_space<vmem>>, vector<1x8xi32>
    %cst = arith.constant dense<0xFF800000> : vector<8xf32>
    %3 = vector.multi_reduction <maximumf>, %1, %cst [0] : vector<32x8xf32> to vector<8xf32>
    %4 = vector.shape_cast %3 : vector<8xf32> to vector<1x8xf32>
    %5 = vector.broadcast %4 : vector<1x8xf32> to vector<32x8xf32>
    %6 = arith.subf %1, %5 : vector<32x8xf32>
    %7 = math.exp %6 : vector<32x8xf32>
    %cst_3 = arith.constant dense<0.000000e+00> : vector<8xf32>
    %8 = vector.multi_reduction <add>, %7, %cst_3 [0] : vector<32x8xf32> to vector<8xf32>
    %9 = vector.shape_cast %8 : vector<8xf32> to vector<1x8xf32>
    %10 = math.log %9 : vector<1x8xf32>
    %11 = tpu.iota {dimensions = array<i32: 0>} : vector<32x8xi32>
    %12 = vector.broadcast %2 : vector<1x8xi32> to vector<32x8xi32>
    %13 = arith.cmpi eq, %11, %12 : vector<32x8xi32>
    %cst_4 = arith.constant 0.000000e+00 : f32
    %14 = vector.broadcast %cst_4 : f32 to vector<32x8xf32>
    %15 = arith.select %13, %6, %14 : vector<32x8xi1>, vector<32x8xf32>
    %cst_5 = arith.constant dense<0.000000e+00> : vector<8xf32>
    %16 = vector.multi_reduction <add>, %15, %cst_5 [0] : vector<32x8xf32> to vector<8xf32>
    %17 = vector.shape_cast %16 : vector<8xf32> to vector<1x8xf32>
    %18 = arith.subf %17, %10 : vector<1x8xf32>
    %cst_6 = arith.constant 0.000000e+00 : f32
    %19 = vector.broadcast %cst_6 : f32 to vector<1x8xf32>
    %20 = arith.subf %19, %18 : vector<1x8xf32>
    %cst_7 = arith.constant 0.699999988 : f32
    %21 = vector.broadcast %cst_7 : f32 to vector<1x8xf32>
    %22 = arith.mulf %21, %18 : vector<1x8xf32>
    %23 = math.exp %22 : vector<1x8xf32>
    %cst_8 = arith.constant 0.699999988 : f32
    %24 = vector.broadcast %cst_8 : f32 to vector<1x8xf32>
    %25 = arith.mulf %23, %24 : vector<1x8xf32>
    %26 = arith.mulf %20, %25 : vector<1x8xf32>
    %c0_9 = arith.constant 0 : index
    %c0_10 = arith.constant 0 : index
    %27 = vector.load %arg3[%c0_9, %c0_10] : memref<1x8xf32, #tpu.memory_space<vmem>>, vector<1x8xf32>
    tpu.vector_store %arg3[%c0_9, %c0_10], %26 {strides = array<i32>} : memref<1x8xf32, #tpu.memory_space<vmem>>, vector<1x8xf32>,
    return
  }
  func.func @transform_0(%arg0: i32) -> (i32, i32) {
    %c0_i32 = arith.constant 0 : i32
    %c0_i32_0 = arith.constant 0 : i32
    return %arg0, %c0_i32 : i32, i32
  }
  func.func @transform_1(%arg0: i32) -> (i32, i32) {
    %c0_i32 = arith.constant 0 : i32
    %c0_i32_0 = arith.constant 0 : i32
    return %c0_i32, %arg0 : i32, i32
  }
  func.func @transform_2(%arg0: i32) -> (i32, i32) {
    %c0_i32 = arith.constant 0 : i32
    %c0_i32_0 = arith.constant 0 : i32
    return %c0_i32, %arg0 : i32, i32
  }
}

</mosaic_0001>

<llo_original>
// kernel: tpu_custom_call.1
$region0: #{tpu_custom_call.1}
  #allocation0 [shape = 'u32[]', space=smem, size = 0x4, offset = 0x4, fixed_abs, tag = 'smem constant byte address 0x4 - core index']
  #allocation1 [shape = 'u32[72,128]{1,0:T(1,128)}', space=vmem, size = 0x9000, scoped, tag = 'internal scratch']
  %s0 = inlined_call_operand.hbm [shape: f32[8,32], index: 0, kind: input, shape index: {}]
  %s1 = inlined_call_operand.hbm [shape: s32[1,8], index: 1, kind: input, shape index: {}]
  %s2 = inlined_call_operand.hbm [shape: f32[1,8], index: 2, kind: output, shape index: {}]
  %s3 = sld [smem:[#allocation0]]
  $region26: #{tpu_custom_call.1} parent=0
    _
  %s5 = ssub.s32 1, %s3
  %s6 = scalar_select 0, %s5, %s3
  $region1: #{tpu_custom_call.1} parent=0
    #allocation2 [shape = 'u8[4096]{0}', space=vmem, size = 0x1000, scoped, tag = 'input window, operand 0, single buffered']
    #allocation3 [shape = 's32[1]{0}', space=sflag, size = 0x4, scoped, tag = 'scoped memory for tpu_custom_call.1']
    #allocation4 [shape = 's32[1]{0}', space=sflag, size = 0x4, scoped, tag = 'scoped memory for tpu_custom_call.1']
    #allocation5 [shape = 'u8[512]{0}', space=vmem, size = 0x400, scoped, tag = 'input window, operand 1, single buffered']
    #allocation6 [shape = 's32[1]{0}', space=sflag, size = 0x4, scoped, tag = 'scoped memory for tpu_custom_call.1']
    #allocation7 [shape = 'u8[512]{0}', space=vmem, size = 0x400, scoped, tag = 'output window, operand 0, single buffered']
    %7 = vsyncpa [#allocation3], 0
    %8 = vsyncpa [#allocation6], 0
    %9 = vsyncpa [#allocation4], 0
    // Predicated region
    $region2: #{tpu_custom_call.1} parent=1 // pred_check
      _
    $region3: #{tpu_custom_call.1} parent=1 // pred_check_branch
      %11 = sbr.rel (0) target = $region5
    $region4: #{tpu_custom_call.1} parent=1 // pred_region
      %13 = vsyncadd [#allocation3], 0
      %s15 = sshll.u32 %s0, 4
      %s16 = int_to_ptr.hbm [resolvable:$true] %s15
      %s17 = sshll.u32 [#allocation2], 4
      %s18 = int_to_ptr.vmem [resolvable:$true] %s17
      %20 = dma.hbm_to_vmem [thread:$0]  %s16, 128, %s18, [#allocation3]
    $region5: #{tpu_custom_call.1} parent=1 // pred_fallthru
      _
    // Predicated region
    $region6: #{tpu_custom_call.1} parent=1 // pred_check
      _
    $region7: #{tpu_custom_call.1} parent=1 // pred_check_branch
      %22 = sbr.rel (0) target = $region9
    $region8: #{tpu_custom_call.1} parent=1 // pred_region
      %24 = vsyncadd [#allocation6], 0
      %s26 = sshll.u32 %s1, 4
      %s27 = int_to_ptr.hbm [resolvable:$true] %s26
      %s28 = sshll.u32 [#allocation5], 4
      %s29 = int_to_ptr.vmem [resolvable:$true] %s28
      %31 = dma.hbm_to_vmem [thread:$0]  %s27, 16, %s29, [#allocation6]
    $region9: #{tpu_custom_call.1} parent=1 // pred_fallthru
      _
    // Predicated region
    $region10: #{tpu_custom_call.1} parent=1 // pred_check
      _
    $region11: #{tpu_custom_call.1} parent=1 // pred_check_branch
      %33 = sbr.rel (0) target = $region13
    $region12: #{tpu_custom_call.1} parent=1 // pred_region
      %35 = dma.done [#allocation3], 128
    $region13: #{tpu_custom_call.1} parent=1 // pred_fallthru
      _
    // Predicated region
    $region14: #{tpu_custom_call.1} parent=1 // pred_check
      _
    $region15: #{tpu_custom_call.1} parent=1 // pred_check_branch
      %37 = sbr.rel (0) target = $region17
    $region16: #{tpu_custom_call.1} parent=1 // pred_region
      %39 = dma.done [#allocation6], 16
    $region17: #{tpu_custom_call.1} parent=1 // pred_fallthru
      _
    %v40 = vld [vmem:[#allocation2] sm:$0xff]
    %41 = vxpose.xlu0.b32.start [1/16] %v40, 128
    %42 = vxpose.xlu0.b32.cont [2/16] 0.0, 128
    %43 = vxpose.xlu0.b32.cont [3/16] 0.0, 128
    %44 = vxpose.xlu0.b32.cont [4/16] 0.0, 128
    %45 = vxpose.xlu0.b32.cont [5/16] 0.0, 128
    %46 = vxpose.xlu0.b32.cont [6/16] 0.0, 128
    %47 = vxpose.xlu0.b32.cont [7/16] 0.0, 128
    %48 = vxpose.xlu0.b32.cont [8/16] 0.0, 128
    %49 = vxpose.xlu0.b32.cont [9/16] 0.0, 128
    %50 = vxpose.xlu0.b32.cont [10/16] 0.0, 128
    %51 = vxpose.xlu0.b32.cont [11/16] 0.0, 128
    %52 = vxpose.xlu0.b32.cont [12/16] 0.0, 128
    %53 = vxpose.xlu0.b32.cont [13/16] 0.0, 128
    %54 = vxpose.xlu0.b32.cont [14/16] 0.0, 128
    %55 = vxpose.xlu0.b32.cont [15/16] 0.0, 128
    %56 = vxpose.xlu0.b32.end [16/16] 0.0, 128
    %v57 = vpop.trf.xlu0
    %v58 = vpop.trf.xlu0
    %v59 = vpop.trf.xlu0
    %v60 = vpop.trf.xlu0
    %v61 = vpop.trf.xlu0
    %v62 = vpop.trf.xlu0
    %v63 = vpop.trf.xlu0
    %v64 = vpop.trf.xlu0
    %v65 = vpop.trf.xlu0
    %v66 = vpop.trf.xlu0
    %v67 = vpop.trf.xlu0
    %v68 = vpop.trf.xlu0
    %v69 = vpop.trf.xlu0
    %v70 = vpop.trf.xlu0
    %v71 = vpop.trf.xlu0
    %v72 = vpop.trf.xlu0
    %v73 = vld [vmem:[#allocation5] sm:$0x1]
    %vm74 = vcmask 64512
    %v75 = vsel %vm74, %v57, -inf
    %v76 = vsel %vm74, %v58, -inf
    %v77 = vsel %vm74, %v59, -inf
    %v78 = vsel %vm74, %v60, -inf
    %v79 = vmax.f32 %v75, %v76
    %v80 = vmax.f32 %v77, %v78
    %v81 = vmax.f32 %v79, %v80
    %v82 = vrot.slane %v81, 4
    %v83 = vmax.f32 %v81, %v82
    %v84 = vrot.slane %v83, 2
    %v85 = vmax.f32 %v83, %v84
    %v86 = vrot.slane %v85, 1
    %v87 = vmax.f32 %v85, %v86
    %v88 = vsub.f32 %v57, %v87
    %v89 = vsub.f32 %v58, %v87
    %v90 = vsub.f32 %v59, %v87
    %v91 = vsub.f32 %v60, %v87
    %v92 = vmul.f32 %v88, 1.442695
    %v93 = vpow.pop %v92
    %v94 = vmul.f32 %v89, 1.442695
    %v95 = vpow.pop %v94
    %v96 = vmul.f32 %v90, 1.442695
    %v97 = vpow.pop %v96
    %v98 = vmul.f32 %v91, 1.442695
    %v99 = vpow.pop %v98
    %v100 = vsel %vm74, %v93, 0.0
    %v101 = vsel %vm74, %v95, 0.0
    %v102 = vadd.f32 %v100, %v101
    %v103 = vsel %vm74, %v97, 0.0
    %v104 = vadd.f32 %v102, %v103
    %v105 = vsel %vm74, %v99, 0.0
    %v106 = vadd.f32 %v104, %v105
    %v107 = vrot.slane %v106, 4
    %v108 = vadd.f32 %v106, %v107
    %v109 = vrot.slane %v108, 2
    %v110 = vadd.f32 %v108, %v109
    %v111 = vrot.slane %v110, 1
    %v112 = vadd.f32 %v110, %v111
    %v113 = vlog2.pop %v112
    %v114 = vmul.f32 %v113, 0.6931472
    %v115 = vlaneseq
    %v116 = vshrl.u32 %v115, 7
    %v117 = vadd.s32 %v116, 8
    %v118 = vadd.s32 %v116, 16
    %v119 = vadd.s32 %v116, 24
    %v120 = vperm.slane %v73, 0
    %vm121 = vcmp.eq.s32.totalorder %v116, %v120
    %vm122 = vcmp.eq.s32.totalorder %v117, %v120
    %vm123 = vcmp.eq.s32.totalorder %v118, %v120
    %vm124 = vcmp.eq.s32.totalorder %v119, %v120
    %v125 = vsel %vm121, %v88, 0.0
    %v126 = vsel %vm122, %v89, 0.0
    %v127 = vsel %vm123, %v90, 0.0
    %v128 = vsel %vm124, %v91, 0.0
    %v129 = vsel %vm74, %v125, 0.0
    %v130 = vsel %vm74, %v126, 0.0
    %v131 = vadd.f32 %v129, %v130
    %v132 = vsel %vm74, %v127, 0.0
    %v133 = vadd.f32 %v131, %v132
    %v134 = vsel %vm74, %v128, 0.0
    %v135 = vadd.f32 %v133, %v134
    %v136 = vrot.slane %v135, 4
    %v137 = vadd.f32 %v135, %v136
    %v138 = vrot.slane %v137, 2
    %v139 = vadd.f32 %v137, %v138
    %v140 = vrot.slane %v139, 1
    %v141 = vadd.f32 %v139, %v140
    %v142 = vsub.f32 %v141, %v114
    %v143 = vsub.f32 0.0, %v142
    %v144 = vmul.f32 %v142, 0.7
    %v145 = vmul.f32 %v144, 1.442695
    %v146 = vpow.pop %v145
    %v147 = vmul.f32 %v146, 0.7
    %v148 = vmul.f32 %v143, %v147
    %vm149 = vcmask 57344
    %150 = vst.msk [vmem:[#allocation7] sm:$0x1] %vm149, %v148
    // Predicated region
    $region18: #{tpu_custom_call.1} parent=1 // pred_check
      _
    $region19: #{tpu_custom_call.1} parent=1 // pred_check_branch
      %152 = sbr.rel (0) target = $region21
    $region20: #{tpu_custom_call.1} parent=1 // pred_region
      %154 = vsyncadd [#allocation4], 0
      %s156 = sshll.u32 [#allocation7], 4
      %s157 = int_to_ptr.vmem [resolvable:$true] %s156
      %s158 = sshll.u32 %s2, 4
      %s159 = int_to_ptr.hbm [resolvable:$true] %s158
      %161 = dma.vmem_to_hbm [thread:$0]  %s157, 16, %s159, [#allocation4]
    $region21: #{tpu_custom_call.1} parent=1 // pred_fallthru
      _
    // Predicated region
    $region22: #{tpu_custom_call.1} parent=1 // pred_check
      _
    $region23: #{tpu_custom_call.1} parent=1 // pred_check_branch
      %163 = sbr.rel (0) target = $region25
    $region24: #{tpu_custom_call.1} parent=1 // pred_region
      %165 = dma.done [#allocation4], 16
    $region25: #{tpu_custom_call.1} parent=1 // pred_fallthru
      _
    %166 = vsyncpa [#allocation3], 1
    %167 = vsyncpa [#allocation6], 1
    %168 = vsyncpa [#allocation4], 1

</llo_original>
